<compile_context>
chip_gen: v5e
topology: v5e:2x2
jax: 0.10.0
libtpu: 0.0.40
codegen_flags: <defaults>
</compile_context>

<pallas_src>
import math

import jax
import jax.numpy as jnp
from jax.experimental import pallas as pl
from jax.experimental.pallas import tpu as pltpu


def create_gaussian_kernel(kernel_size: int, sigma: float):
    """Same math as the PyTorch module's create_gaussian_kernel (float32)."""
    half = kernel_size // 2
    xs = [float(i) for i in range(-half, half + 1)]
    taps = [math.exp(-(x * x) / (2.0 * sigma * sigma)) for x in xs]
    s = sum(taps)
    return [t / s for t in taps]


def make_blur_kernel(taps):
    """Pallas kernel body with the Gaussian taps baked in as constants."""
    K = len(taps)
    half = K // 2

    def blur_kernel(x_ref, out_ref):
        # x_ref / out_ref: (TB, L) in VMEM.  Padding is fused here: the zero
        # halo is created in VMEM only (no extra HBM pass).
        x = x_ref[...].astype(jnp.float32)
        tb, lblk = x.shape

        if half > 0:
            z = jnp.zeros((tb, half), jnp.float32)
            xp = jnp.concatenate([z, x, z], axis=1)          # (TB, L + K - 1)
        else:
            xp = x

        # Correlation (what nn.Conv1d computes):
        #   out[l] = sum_s taps[half + s] * x[l + s],  s in [-half, half]
        # Symmetric taps: taps[half - s] == taps[half + s]  ->  ceil(K/2) muls.
        acc = jnp.float32(taps[half]) * x                    # center term
        for s in range(1, half + 1):
            pair = (xp[:, half + s: half + s + lblk]
                    + xp[:, half - s: half - s + lblk])
            acc = acc + jnp.float32(taps[half + s]) * pair

        out_ref[...] = acc.astype(out_ref.dtype)

    return blur_kernel


def _pick_batch_tile(B: int, L: int, itemsize: int):
    """Batch tile: multiple of 8 (or == B), ~2 MiB per tile, capped at 512 rows."""
    target_tile_bytes = 2 * 1024 * 1024
    row_bytes = max(1, L * itemsize)
    rows_budget = max(8, (target_tile_bytes // row_bytes) // 8 * 8)
    tb = min(((B + 7) // 8) * 8, rows_budget, 512)
    if tb >= B:
        return B, 1                      # single full-dim block (always legal)
    return tb, pl.cdiv(B, tb)            # ragged last block handled by Pallas


def gaussian_blur_1d(x, kernel_size: int = 5, sigma: float = 1.0):
    """
    x: (B, 1, L)  ->  (B, 1, L)
    Matches GaussianBlur1D.forward (Conv1d, stride=1, padding=K//2, no bias).
    """
    assert x.ndim == 3 and x.shape[1] == 1, "expected (B, 1, L)"
    assert kernel_size % 2 == 1, (
        "even kernel_size would change Conv1d output length; only odd supported")
    B, _, L = x.shape
    taps = create_gaussian_kernel(kernel_size, sigma)

    x2d = x[:, 0, :]                                        # (B, L), unpadded
    itemsize = jnp.dtype(x.dtype).itemsize
    tb, num_b = _pick_batch_tile(B, L, itemsize)

    kernel = make_blur_kernel(taps)

    cost = pl.CostEstimate(
        flops=2 * kernel_size * B * L,
        transcendentals=0,
        bytes_accessed=2 * B * L * itemsize,
    )

    out2d = pl.pallas_call(
        kernel,
        out_shape=jax.ShapeDtypeStruct((B, L), x.dtype),
        grid=(num_b,),
        in_specs=[pl.BlockSpec((tb, L), lambda i: (i, 0))],
        out_specs=pl.BlockSpec((tb, L), lambda i: (i, 0)),
        compiler_params=pltpu.CompilerParams(
            dimension_semantics=("parallel",),
            vmem_limit_bytes=32 * 1024 * 1024,
        ),
        cost_estimate=cost,
    )(x2d)

    return out2d[:, None, :]                                # (B, 1, L)


def _reference(x, kernel_size, sigma):
    """Pure-JAX reference with identical semantics (explicit pad + correlate)."""
    B, _, L = x.shape
    pad = kernel_size // 2
    taps = jnp.asarray(create_gaussian_kernel(kernel_size, sigma), jnp.float32)
    xp = jnp.pad(x[:, 0, :].astype(jnp.float32), ((0, 0), (pad, pad)))
    ref = jnp.zeros((B, L), jnp.float32)
    for t in range(kernel_size):
        ref = ref + taps[t] * xp[:, t:t + L]
    return ref


if __name__ == "__main__":
    key = jax.random.PRNGKey(0)

    # Small shape consistent with the module: (B, 1, L).
    B, L = 2, 16
    x = jax.random.normal(key, (B, 1, L), dtype=jnp.float32)
    out = gaussian_blur_1d(x, kernel_size=5, sigma=1.0)
    out = jax.block_until_ready(out)
    assert out.shape == (B, 1, L)
    assert jnp.allclose(out[:, 0, :], _reference(x, 5, 1.0), atol=1e-5, rtol=1e-5)

    # Second check exercising a multi-block (ragged) batch grid.
    B2, L2 = 1040, 384
    x2 = jax.random.normal(jax.random.PRNGKey(0), (B2, 1, L2), dtype=jnp.float32)
    out2 = jax.block_until_ready(gaussian_blur_1d(x2, kernel_size=5, sigma=1.0))
    assert out2.shape == (B2, 1, L2)
    assert jnp.allclose(out2[:, 0, :], _reference(x2, 5, 1.0), atol=1e-5, rtol=1e-5)

    print("KERNEL_OK")
</pallas_src>

<mosaic_0001>
module attributes {stable_mosaic.version = 11 : i64} {
  func.func @blur_kernel(%arg0: i32, %arg1: memref<2x16xf32, #tpu.memory_space<vmem>>, %arg2: memref<2x16xf32, #tpu.memory_space<vmem>>) attributes {dimension_semantics = [#tpu.dimension_semantics<parallel>], iteration_bounds = array<i64: 1>, scalar_prefetch = 0 : i64, scratch_operands = 0 : i64, tpu.core_type = #tpu.core_type<tc>, window_params = [{transform_indices = @transform_0, window_bounds = array<i64: 2, 16>}, {transform_indices = @transform_1, window_bounds = array<i64: 2, 16>}]} {
    %c0 = arith.constant 0 : index
    %c0_0 = arith.constant 0 : index
    %0 = vector.load %arg1[%c0, %c0_0] : memref<2x16xf32, #tpu.memory_space<vmem>>, vector<2x16xf32>
    %cst = arith.constant 0.000000e+00 : f32
    %1 = vector.broadcast %cst : f32 to vector<2x2xf32>
    %2 = tpu.concatenate %1, %0, %1 in 1 : vector<2x2xf32>, vector<2x16xf32>, vector<2x2xf32> -> vector<2x20xf32>
    %cst_1 = arith.constant 0.402619958 : f32
    %3 = vector.broadcast %cst_1 : f32 to vector<2x16xf32>
    %4 = arith.mulf %3, %0 : vector<2x16xf32>
    %5 = vector.extract_strided_slice %2 {offsets = [0, 3], sizes = [2, 16], strides = [1, 1]} : vector<2x20xf32> to vector<2x16xf32>
    %6 = vector.extract_strided_slice %2 {offsets = [0, 1], sizes = [2, 16], strides = [1, 1]} : vector<2x20xf32> to vector<2x16xf32>
    %7 = arith.addf %5, %6 : vector<2x16xf32>
    %cst_2 = arith.constant 0.244201347 : f32
    %8 = vector.broadcast %cst_2 : f32 to vector<2x16xf32>
    %9 = arith.mulf %8, %7 : vector<2x16xf32>
    %10 = arith.addf %4, %9 : vector<2x16xf32>
    %11 = vector.extract_strided_slice %2 {offsets = [0, 4], sizes = [2, 16], strides = [1, 1]} : vector<2x20xf32> to vector<2x16xf32>
    %12 = vector.extract_strided_slice %2 {offsets = [0, 0], sizes = [2, 16], strides = [1, 1]} : vector<2x20xf32> to vector<2x16xf32>
    %13 = arith.addf %11, %12 : vector<2x16xf32>
    %cst_3 = arith.constant 0.054488685 : f32
    %14 = vector.broadcast %cst_3 : f32 to vector<2x16xf32>
    %15 = arith.mulf %14, %13 : vector<2x16xf32>
    %16 = arith.addf %10, %15 : vector<2x16xf32>
    %c0_4 = arith.constant 0 : index
    %c0_5 = arith.constant 0 : index
    %17 = vector.load %arg2[%c0_4, %c0_5] : memref<2x16xf32, #tpu.memory_space<vmem>>, vector<2x16xf32>
    tpu.vector_store %arg2[%c0_4, %c0_5], %16 {strides = array<i32>} : memref<2x16xf32, #tpu.memory_space<vmem>>, vector<2x16xf32>,
    return
  }
  func.func @transform_0(%arg0: i32) -> (i32, i32) {
    %c0_i32 = arith.constant 0 : i32
    %c0_i32_0 = arith.constant 0 : i32
    return %arg0, %c0_i32 : i32, i32
  }
  func.func @transform_1(%arg0: i32) -> (i32, i32) {
    %c0_i32 = arith.constant 0 : i32
    %c0_i32_0 = arith.constant 0 : i32
    return %arg0, %c0_i32 : i32, i32
  }
}

</mosaic_0001>

<llo_original>
// kernel: tpu_custom_call.1
$region0: #{tpu_custom_call.1}
  #allocation0 [shape = 'u32[]', space=smem, size = 0x4, offset = 0x4, fixed_abs, tag = 'smem constant byte address 0x4 - core index']
  #allocation1 [shape = 'u32[72,128]{1,0:T(1,128)}', space=vmem, size = 0x9000, scoped, tag = 'internal scratch']
  %s0 = inlined_call_operand.hbm [shape: f32[2,16], index: 0, kind: input, shape index: {}]
  %s1 = inlined_call_operand.hbm [shape: f32[2,16], index: 1, kind: output, shape index: {}]
  %s2 = sld [smem:[#allocation0]]
  $region18: #{tpu_custom_call.1} parent=0
    _
  %s4 = ssub.s32 1, %s2
  %s5 = scalar_select 0, %s4, %s2
  $region1: #{tpu_custom_call.1} parent=0
    #allocation2 [shape = 'u8[1024]{0}', space=vmem, size = 0x400, scoped, tag = 'input window, operand 0, single buffered']
    #allocation3 [shape = 's32[1]{0}', space=sflag, size = 0x4, scoped, tag = 'scoped memory for tpu_custom_call.1']
    #allocation4 [shape = 's32[1]{0}', space=sflag, size = 0x4, scoped, tag = 'scoped memory for tpu_custom_call.1']
    #allocation5 [shape = 'u8[1024]{0}', space=vmem, size = 0x400, scoped, tag = 'output window, operand 0, single buffered']
    %6 = vsyncpa [#allocation3], 0
    %7 = vsyncpa [#allocation4], 0
    // Predicated region
    $region2: #{tpu_custom_call.1} parent=1 // pred_check
      _
    $region3: #{tpu_custom_call.1} parent=1 // pred_check_branch
      %9 = sbr.rel (0) target = $region5
    $region4: #{tpu_custom_call.1} parent=1 // pred_region
      %11 = vsyncadd [#allocation3], 0
      %s13 = sshll.u32 %s0, 4
      %s14 = int_to_ptr.hbm [resolvable:$true] %s13
      %s15 = sshll.u32 [#allocation2], 4
      %s16 = int_to_ptr.vmem [resolvable:$true] %s15
      %18 = dma.hbm_to_vmem [thread:$0]  %s14, 32, %s16, [#allocation3]
    $region5: #{tpu_custom_call.1} parent=1 // pred_fallthru
      _
    // Predicated region
    $region6: #{tpu_custom_call.1} parent=1 // pred_check
      _
    $region7: #{tpu_custom_call.1} parent=1 // pred_check_branch
      %20 = sbr.rel (0) target = $region9
    $region8: #{tpu_custom_call.1} parent=1 // pred_region
      %22 = dma.done [#allocation3], 32
    $region9: #{tpu_custom_call.1} parent=1 // pred_fallthru
      _
    %v23 = vld [vmem:[#allocation2] sm:$0x3]
    %25 = vrot.lane.b32.xlu0 %v23, 2
    %v26 = vpop.permute.xlu0 %25
    %vm28 = vcmask 15360
    %v29 = vsel %vm28, 0.0, %v26
    %vm30 = vcmask 146432
    %v31 = vsel %vm30, %v29, 0.0
    %v32 = vmul.f32 %v23, 0.40261996
    %34 = vrot.lane.b32.xlu0 %v31, 2
    %v35 = vpop.permute.xlu0 %34
    %v37 = vadd.f32 %v31, %v35
    %v38 = vmul.f32 %v37, 0.24420135
    %40 = vrot.lane.b32.xlu0 %v38, 125
    %v41 = vpop.permute.xlu0 %40
    %v43 = vadd.f32 %v32, %v41
    %44 = vrot.lane.b32.xlu0 %v31, 4
    %v45 = vpop.permute.xlu0 %44
    %v47 = vadd.f32 %v31, %v45
    %v48 = vmul.f32 %v47, 0.054488685
    %50 = vrot.lane.b32.xlu0 %v48, 124
    %v51 = vpop.permute.xlu0 %50
    %v53 = vadd.f32 %v43, %v51
    %vm54 = vcmask 123904
    %55 = vst.msk [vmem:[#allocation5] sm:$0x3] %vm54, %v53
    // Predicated region
    $region10: #{tpu_custom_call.1} parent=1 // pred_check
      _
    $region11: #{tpu_custom_call.1} parent=1 // pred_check_branch
      %57 = sbr.rel (0) target = $region13
    $region12: #{tpu_custom_call.1} parent=1 // pred_region
      %59 = vsyncadd [#allocation4], 0
      %s61 = sshll.u32 [#allocation5], 4
      %s62 = int_to_ptr.vmem [resolvable:$true] %s61
      %s63 = sshll.u32 %s1, 4
      %s64 = int_to_ptr.hbm [resolvable:$true] %s63
      %66 = dma.vmem_to_hbm [thread:$0]  %s62, 32, %s64, [#allocation4]
    $region13: #{tpu_custom_call.1} parent=1 // pred_fallthru
      _
    // Predicated region
    $region14: #{tpu_custom_call.1} parent=1 // pred_check
      _
    $region15: #{tpu_custom_call.1} parent=1 // pred_check_branch
      %68 = sbr.rel (0) target = $region17
    $region16: #{tpu_custom_call.1} parent=1 // pred_region
      %70 = dma.done [#allocation4], 32
    $region17: #{tpu_custom_call.1} parent=1 // pred_fallthru
      _
    %71 = vsyncpa [#allocation3], 1
    %72 = vsyncpa [#allocation4], 1

</llo_original>
